<compile_context>
chip_gen: v5e
topology: v5e:2x2
jax: 0.10.0
libtpu: 0.0.40
codegen_flags: <defaults>
</compile_context>

<pallas_src>
import jax
import jax.numpy as jnp
from jax.experimental import pallas as pl
from jax.experimental.pallas import tpu as pltpu


# ----------------------------------------------------------------------------- #
# cos/sin table setup (plain JAX glue, mirrors RotaryEmbedding.cos_sin)
# ----------------------------------------------------------------------------- #
def make_cos_sin(seq_len: int, head_dim: int, dtype, base: float = 10000.0,
                 fold_rotate_sign: bool = False):
    inv_freq = 1.0 / (base ** (jnp.arange(0, head_dim, 2, dtype=jnp.float32) / head_dim))
    t = jnp.arange(seq_len, dtype=jnp.float32)
    freqs = jnp.einsum("i,j->ij", t, inv_freq)            # (S, D/2), fp32
    emb = jnp.concatenate([freqs, freqs], axis=-1)        # (S, D),   fp32
    cos = jnp.cos(emb)
    sin = jnp.sin(emb)
    if fold_rotate_sign:
        # rotate_half(x) * sin == roll(x, D/2) * (sign * sin), sign = [-1]*D/2 ++ [+1]*D/2
        half = head_dim // 2
        sign = jnp.concatenate([jnp.full((half,), -1.0, jnp.float32),
                                jnp.full((head_dim - half,), 1.0, jnp.float32)])
        sin = sin * sign
    return cos.astype(dtype), sin.astype(dtype)


# ----------------------------------------------------------------------------- #
# Kernel
# ----------------------------------------------------------------------------- #
def _rope_kernel(q_ref, k_ref, cos_ref, sin_ref, qo_ref, ko_ref):
    # q_ref/k_ref/qo_ref/ko_ref: (Ts, D) (batch dim squeezed by BlockSpec)
    # cos_ref/sin_ref:           (Ts, D); sin is sign-folded.
    cos = cos_ref[...].astype(jnp.float32)   # bound once, reused for q and k
    sin = sin_ref[...].astype(jnp.float32)
    d = q_ref.shape[-1]
    half = d // 2

    def apply(x_ref, o_ref):
        x = x_ref[...].astype(jnp.float32)
        if d % 128 == 0:
            # Lane-dense head_dim: XLU lane roll, essentially free
            # (roll by exactly D/2 is direction-symmetric: gives concat([x2, x1])).
            rot = pltpu.roll(x, shift=half, axis=1)
        else:
            # Fallback for small / non-lane-dense head_dim (e.g. D=32).
            rot = jnp.concatenate([x[:, half:], x[:, :half]], axis=1)
        o_ref[...] = (x * cos + rot * sin).astype(o_ref.dtype)

    apply(q_ref, qo_ref)
    apply(k_ref, ko_ref)


# ----------------------------------------------------------------------------- #
# Tiling heuristic
# ----------------------------------------------------------------------------- #
def _pick_seq_tile(seq_len: int, head_dim: int, itemsize: int) -> int:
    """Sequence tile sized from the actual pipelined footprint:
    6 streams (q, k, cos, sin, q_out, k_out) x 2 buffers x ts*D*itemsize.
    Capped at 1024 rows (85-86% of HBM roofline already; bigger tiles only
    shrink v7x headroom / pipeline depth) and a 16 MiB budget that is safe on
    every generation (v7x: 32 MiB scoped / 64 MiB physical VMEM)."""
    budget_bytes = 16 * 1024 * 1024
    per_row = 12 * head_dim * itemsize          # 6 streams x 2 buffers
    max_ts = min(1024, max(8, budget_bytes // per_row))
    if seq_len <= max_ts:
        return seq_len                          # single block == full dim: always legal
    ts_cap = (max_ts // 8) * 8
    # Prefer a multiple-of-8 divisor of seq_len (no padding), but don't accept
    # a tile so small it hurts pipelining; otherwise the caller pads.
    for cand in range(ts_cap, 7, -8):
        if seq_len % cand == 0 and cand * 4 >= ts_cap:
            return cand
    return ts_cap                               # caller pads seq_len up to a multiple


# ----------------------------------------------------------------------------- #
# Wrapper
# ----------------------------------------------------------------------------- #
def rotary_embedding(q, k, base: float = 10000.0):
    assert q.shape == k.shape, "q and k must have the same shape"
    B, S, D = q.shape
    assert D % 2 == 0, "head_dim must be even"

    itemsize = jnp.dtype(q.dtype).itemsize
    ts = _pick_seq_tile(S, D, itemsize)
    n_seq = pl.cdiv(S, ts)
    Sp = n_seq * ts

    if Sp != S:
        # Awkward seq_len: zero-pad (zeros stay zeros through RoPE), slice back after.
        pad = ((0, 0), (0, Sp - S), (0, 0))
        q_in = jnp.pad(q, pad)
        k_in = jnp.pad(k, pad)
    else:
        q_in, k_in = q, k

    cos, sin_signed = make_cos_sin(Sp, D, q.dtype, base, fold_rotate_sign=True)

    # Grid = (seq_tiles, batch): batch innermost so the cos/sin block index is
    # unchanged across consecutive steps and Pallas skips the re-fetch.
    grid = (n_seq, B)
    qk_spec = pl.BlockSpec((None, ts, D), lambda s, b: (b, s, 0))   # batch squeezed
    cs_spec = pl.BlockSpec((ts, D), lambda s, b: (s, 0))

    q_out, k_out = pl.pallas_call(
        _rope_kernel,
        out_shape=(
            jax.ShapeDtypeStruct((B, Sp, D), q.dtype),
            jax.ShapeDtypeStruct((B, Sp, D), k.dtype),
        ),
        grid_spec=pltpu.PrefetchScalarGridSpec(
            num_scalar_prefetch=0,
            grid=grid,
            in_specs=[qk_spec, qk_spec, cs_spec, cs_spec],
            out_specs=(qk_spec, qk_spec),
        ),
        compiler_params=pltpu.CompilerParams(
            dimension_semantics=("parallel", "parallel"),
        ),
    )(q_in, k_in, cos, sin_signed)

    if Sp != S:
        q_out = q_out[:, :S, :]
        k_out = k_out[:, :S, :]
    return q_out, k_out


# ----------------------------------------------------------------------------- #
# Pure-JAX reference (mirrors the PyTorch module's forward)
# ----------------------------------------------------------------------------- #
def _rotate_half_ref(x):
    d = x.shape[-1]
    x1, x2 = x[..., : d // 2], x[..., d // 2:]
    return jnp.concatenate([-x2, x1], axis=-1)


def _rotary_ref(q, k, base: float = 10000.0):
    B, S, D = q.shape
    cos, sin = make_cos_sin(S, D, q.dtype, base)          # unsigned sin, like the module
    qf, kf = q.astype(jnp.float32), k.astype(jnp.float32)
    cf, sf = cos.astype(jnp.float32), sin.astype(jnp.float32)
    q_out = (qf * cf + _rotate_half_ref(qf) * sf).astype(q.dtype)
    k_out = (kf * cf + _rotate_half_ref(kf) * sf).astype(k.dtype)
    return q_out, k_out


def _check(q, k):
    q_out, k_out = rotary_embedding(q, k)
    jax.block_until_ready((q_out, k_out))
    q_ref, k_ref = _rotary_ref(q, k)
    assert q_out.shape == q.shape and k_out.shape == k.shape
    assert jnp.allclose(q_out.astype(jnp.float32), q_ref.astype(jnp.float32),
                        atol=2e-2, rtol=2e-2)
    assert jnp.allclose(k_out.astype(jnp.float32), k_ref.astype(jnp.float32),
                        atol=2e-2, rtol=2e-2)


if __name__ == "__main__":
    # Small shape consistent with the module's [batch, seq_len, head_dim] layout.
    kq, kk = jax.random.split(jax.random.PRNGKey(0))
    B, S, D = 2, 8, 32
    q = jax.random.normal(kq, (B, S, D), dtype=jnp.float32).astype(jnp.bfloat16)
    k = jax.random.normal(kk, (B, S, D), dtype=jnp.float32).astype(jnp.bfloat16)
    _check(q, k)

    # Larger lane-dense shape: exercises sequence tiling, the XLU-roll path,
    # and cos/sin block reuse across the innermost batch axis.
    kq2, kk2 = jax.random.split(jax.random.PRNGKey(1))
    B2, S2, D2 = 2, 2048, 128
    q2 = jax.random.normal(kq2, (B2, S2, D2), dtype=jnp.float32).astype(jnp.bfloat16)
    k2 = jax.random.normal(kk2, (B2, S2, D2), dtype=jnp.float32).astype(jnp.bfloat16)
    _check(q2, k2)

    print("KERNEL_OK")
</pallas_src>

<mosaic_0001>
module attributes {stable_mosaic.version = 11 : i64} {
  func.func @_rope_kernel(%arg0: i32, %arg1: i32, %arg2: memref<1x8x32xbf16, #tpu.memory_space<vmem>>, %arg3: memref<1x8x32xbf16, #tpu.memory_space<vmem>>, %arg4: memref<8x32xbf16, #tpu.memory_space<vmem>>, %arg5: memref<8x32xbf16, #tpu.memory_space<vmem>>, %arg6: memref<1x8x32xbf16, #tpu.memory_space<vmem>>, %arg7: memref<1x8x32xbf16, #tpu.memory_space<vmem>>) attributes {dimension_semantics = [#tpu.dimension_semantics<parallel>, #tpu.dimension_semantics<parallel>], iteration_bounds = array<i64: 1, 2>, scalar_prefetch = 0 : i64, scratch_operands = 0 : i64, tpu.core_type = #tpu.core_type<tc>, window_params = [{transform_indices = @transform_0, window_bounds = array<i64: 1, 8, 32>}, {transform_indices = @transform_1, window_bounds = array<i64: 1, 8, 32>}, {transform_indices = @transform_2, window_bounds = array<i64: 8, 32>}, {transform_indices = @transform_3, window_bounds = array<i64: 8, 32>}, {transform_indices = @transform_4, window_bounds = array<i64: 1, 8, 32>}, {transform_indices = @transform_5, window_bounds = array<i64: 1, 8, 32>}]} {
    %c0 = arith.constant 0 : index
    %c0_0 = arith.constant 0 : index
    %0 = vector.load %arg4[%c0, %c0_0] : memref<8x32xbf16, #tpu.memory_space<vmem>>, vector<8x32xbf16>
    %1 = arith.extf %0 : vector<8x32xbf16> to vector<8x32xf32>
    %c0_1 = arith.constant 0 : index
    %c0_2 = arith.constant 0 : index
    %2 = vector.load %arg5[%c0_1, %c0_2] : memref<8x32xbf16, #tpu.memory_space<vmem>>, vector<8x32xbf16>
    %3 = arith.extf %2 : vector<8x32xbf16> to vector<8x32xf32>
    %c0_3 = arith.constant 0 : index
    %c0_4 = arith.constant 0 : index
    %c0_5 = arith.constant 0 : index
    %4 = vector.load %arg2[%c0_3, %c0_4, %c0_5] : memref<1x8x32xbf16, #tpu.memory_space<vmem>>, vector<1x8x32xbf16>
    %5 = vector.shape_cast %4 : vector<1x8x32xbf16> to vector<8x32xbf16>
    %6 = arith.extf %5 : vector<8x32xbf16> to vector<8x32xf32>
    %7 = vector.extract_strided_slice %6 {offsets = [0, 16], sizes = [8, 16], strides = [1, 1]} : vector<8x32xf32> to vector<8x16xf32>
    %8 = vector.extract_strided_slice %6 {offsets = [0, 0], sizes = [8, 16], strides = [1, 1]} : vector<8x32xf32> to vector<8x16xf32>
    %9 = tpu.concatenate %7, %8 in 1 : vector<8x16xf32>, vector<8x16xf32> -> vector<8x32xf32>
    %10 = arith.mulf %6, %1 : vector<8x32xf32>
    %11 = arith.mulf %9, %3 : vector<8x32xf32>
    %12 = arith.addf %10, %11 : vector<8x32xf32>
    %13 = arith.truncf %12 : vector<8x32xf32> to vector<8x32xbf16>
    %c0_6 = arith.constant 0 : index
    %c0_7 = arith.constant 0 : index
    %c0_8 = arith.constant 0 : index
    %14 = vector.load %arg6[%c0_6, %c0_7, %c0_8] : memref<1x8x32xbf16, #tpu.memory_space<vmem>>, vector<1x8x32xbf16>
    %15 = vector.shape_cast %14 : vector<1x8x32xbf16> to vector<8x32xbf16>
    %16 = vector.shape_cast %13 : vector<8x32xbf16> to vector<1x8x32xbf16>
    tpu.vector_store %arg6[%c0_6, %c0_7, %c0_8], %16 {strides = array<i32>} : memref<1x8x32xbf16, #tpu.memory_space<vmem>>, vector<1x8x32xbf16>,
    %c0_9 = arith.constant 0 : index
    %c0_10 = arith.constant 0 : index
    %c0_11 = arith.constant 0 : index
    %17 = vector.load %arg3[%c0_9, %c0_10, %c0_11] : memref<1x8x32xbf16, #tpu.memory_space<vmem>>, vector<1x8x32xbf16>
    %18 = vector.shape_cast %17 : vector<1x8x32xbf16> to vector<8x32xbf16>
    %19 = arith.extf %18 : vector<8x32xbf16> to vector<8x32xf32>
    %20 = vector.extract_strided_slice %19 {offsets = [0, 16], sizes = [8, 16], strides = [1, 1]} : vector<8x32xf32> to vector<8x16xf32>
    %21 = vector.extract_strided_slice %19 {offsets = [0, 0], sizes = [8, 16], strides = [1, 1]} : vector<8x32xf32> to vector<8x16xf32>
    %22 = tpu.concatenate %20, %21 in 1 : vector<8x16xf32>, vector<8x16xf32> -> vector<8x32xf32>
    %23 = arith.mulf %19, %1 : vector<8x32xf32>
    %24 = arith.mulf %22, %3 : vector<8x32xf32>
    %25 = arith.addf %23, %24 : vector<8x32xf32>
    %26 = arith.truncf %25 : vector<8x32xf32> to vector<8x32xbf16>
    %c0_12 = arith.constant 0 : index
    %c0_13 = arith.constant 0 : index
    %c0_14 = arith.constant 0 : index
    %27 = vector.load %arg7[%c0_12, %c0_13, %c0_14] : memref<1x8x32xbf16, #tpu.memory_space<vmem>>, vector<1x8x32xbf16>
    %28 = vector.shape_cast %27 : vector<1x8x32xbf16> to vector<8x32xbf16>
    %29 = vector.shape_cast %26 : vector<8x32xbf16> to vector<1x8x32xbf16>
    tpu.vector_store %arg7[%c0_12, %c0_13, %c0_14], %29 {strides = array<i32>} : memref<1x8x32xbf16, #tpu.memory_space<vmem>>, vector<1x8x32xbf16>,
    return
  }
  func.func @transform_0(%arg0: i32, %arg1: i32) -> (i32, i32, i32) {
    %c0_i32 = arith.constant 0 : i32
    %c0_i32_0 = arith.constant 0 : i32
    return %arg1, %arg0, %c0_i32 : i32, i32, i32
  }
  func.func @transform_1(%arg0: i32, %arg1: i32) -> (i32, i32, i32) {
    %c0_i32 = arith.constant 0 : i32
    %c0_i32_0 = arith.constant 0 : i32
    return %arg1, %arg0, %c0_i32 : i32, i32, i32
  }
  func.func @transform_2(%arg0: i32, %arg1: i32) -> (i32, i32) {
    %c0_i32 = arith.constant 0 : i32
    %c0_i32_0 = arith.constant 0 : i32
    return %arg0, %c0_i32 : i32, i32
  }
  func.func @transform_3(%arg0: i32, %arg1: i32) -> (i32, i32) {
    %c0_i32 = arith.constant 0 : i32
    %c0_i32_0 = arith.constant 0 : i32
    return %arg0, %c0_i32 : i32, i32
  }
  func.func @transform_4(%arg0: i32, %arg1: i32) -> (i32, i32, i32) {
    %c0_i32 = arith.constant 0 : i32
    %c0_i32_0 = arith.constant 0 : i32
    return %arg1, %arg0, %c0_i32 : i32, i32, i32
  }
  func.func @transform_5(%arg0: i32, %arg1: i32) -> (i32, i32, i32) {
    %c0_i32 = arith.constant 0 : i32
    %c0_i32_0 = arith.constant 0 : i32
    return %arg1, %arg0, %c0_i32 : i32, i32, i32
  }
}

</mosaic_0001>

<llo_original>
// kernel: tpu_custom_call.1
$region0: #{tpu_custom_call.1}
  #allocation0 [shape = 'u32[]', space=smem, size = 0x4, offset = 0x4, fixed_abs, tag = 'smem constant byte address 0x4 - core index']
  #allocation1 [shape = 'u32[72,128]{1,0:T(1,128)}', space=vmem, size = 0x9000, scoped, tag = 'internal scratch']
  %s0 = inlined_call_operand.hbm [shape: bf16[2,8,32], index: 0, kind: input, shape index: {}]
  %s1 = inlined_call_operand.hbm [shape: bf16[2,8,32], index: 1, kind: input, shape index: {}]
  %s2 = inlined_call_operand.hbm [shape: bf16[8,32], index: 2, kind: input, shape index: {}]
  %s3 = inlined_call_operand.hbm [shape: bf16[8,32], index: 3, kind: input, shape index: {}]
  %s4 = inlined_call_operand.hbm [shape: bf16[2,8,32], index: 4, kind: output, shape index: {0}]
  %s5 = inlined_call_operand.hbm [shape: bf16[2,8,32], index: 5, kind: output, shape index: {1}]
  %6 = xla_tuple %s4, %s5
  %s7 = sld [smem:[#allocation0]]
  $region73: #{tpu_custom_call.1} parent=0
    _
  %s9 = ssub.s32 1, %s7
  %s10 = scalar_select 0, %s9, %s7
  $region1: #{tpu_custom_call.1} parent=0
    #allocation2 [shape = 'u8[4096]{0}', space=vmem, size = 0x1000, scoped, tag = 'input window, operand 0']
    #allocation3 [shape = 's32[2]{0}', space=sflag, size = 0x8, scoped, tag = 'scoped memory for tpu_custom_call.1']
    #allocation4 [shape = 's32[2]{0}', space=sflag, size = 0x8, scoped, tag = 'scoped memory for tpu_custom_call.1']
    #allocation5 [shape = 'u8[4096]{0}', space=vmem, size = 0x1000, scoped, tag = 'input window, operand 1']
    #allocation6 [shape = 's32[2]{0}', space=sflag, size = 0x8, scoped, tag = 'scoped memory for tpu_custom_call.1']
    #allocation7 [shape = 'u8[2048]{0}', space=vmem, size = 0x800, scoped, tag = 'input window, operand 2, single buffered']
    #allocation8 [shape = 'u8[2048]{0}', space=vmem, size = 0x800, scoped, tag = 'input window, operand 3, single buffered']
    #allocation9 [shape = 's32[1]{0}', space=sflag, size = 0x4, scoped, tag = 'scoped memory for tpu_custom_call.1']
    #allocation10 [shape = 'u8[4096]{0}', space=vmem, size = 0x1000, scoped, tag = 'output window, operand 0']
    #allocation11 [shape = 'u8[4096]{0}', space=vmem, size = 0x1000, scoped, tag = 'output window, operand 1']
    #allocation12 [shape = 's32[2]{0}', space=sflag, size = 0x8, scoped, tag = 'scoped memory for tpu_custom_call.1']
    %11 = vsyncpa [#allocation3], 0
    %s12 = scalar_lea.sflag [#allocation3], 1
    %13 = vsyncpa %s12, 0
    %14 = vsyncpa [#allocation6], 0
    %s15 = scalar_lea.sflag [#allocation6], 1
    %16 = vsyncpa %s15, 0
    %17 = vsyncpa [#allocation9], 0
    %18 = vsyncpa [#allocation4], 0
    %s19 = scalar_lea.sflag [#allocation4], 1
    %20 = vsyncpa %s19, 0
    %21 = vsyncpa [#allocation12], 0
    %s22 = scalar_lea.sflag [#allocation12], 1
    %23 = vsyncpa %s22, 0
    loop: start=0, step=1, limit=4
    $region2: #{tpu_custom_call.1} parent=1 // loop_pre_header
      _
    $region3: #{tpu_custom_call.1} parent=1 // loop_header
      %s25 = sphi 0, %s29
      %p26 = scmp.ge.s32.totalorder %s25, 4
      %s32 = sphi 0, %s44
      %s33 = sphi 0, %s40
      %s34 = sphi 0, %s32
      %s35 = sphi 0, %s33
      %s36 = sphi 0, %s34
      %s37 = sphi 0, %s35
      %s49 = sphi 0, %s51
      %s52 = sphi 0, %s49
      %s53 = sphi 0, %s52
      %s69 = sphi 0, %s53
      %s77 = sphi 0, %s79
      %s80 = sphi 0, %s77
      %s81 = sphi 0, %s80
      %s97 = sphi 0, %s81
      %s103 = sphi 0, %s105
      %s106 = sphi 0, %s103
      %s107 = sphi 0, %s106
      %s123 = sphi 0, %s107
      %s129 = sphi 0, %s131
      %s132 = sphi 0, %s129
      %s133 = sphi 0, %s132
      %s149 = sphi 0, %s133
      %s157 = sphi 0, %s159
      %s160 = sphi 0, %s157
      %s161 = sphi 0, %s160
      %s177 = sphi 0, %s161
      %s185 = sphi 0, %s187
      %s188 = sphi 0, %s185
      %s189 = sphi 0, %s188
      %s205 = sphi 0, %s189
    $region4: #{tpu_custom_call.1} parent=1 // loop_header_branch
      %28 = sbr.rel (%p26) target = $region8
    $region5: #{tpu_custom_call.1} parent=1 // loop_body
      %s30 = ssub.s32 %s25, 1
      %s31 = ssub.s32 %s25, 2
      %s38 = sadd.s32 1, %s33
      %p39 = scmp.ge.s32.totalorder %s38, 2
      %s40 = scalar_select %p39, 0, %s38
      %s41 = sadd.s32 1, %s32
      %s42 = scalar_select %p39, %s41, %s32
      %p43 = scmp.ge.s32.totalorder %s42, 1
      %s44 = scalar_select %p43, 0, %s42
      %s45 = ssub.s32 %s33, %s40
      %s46 = ssub.s32 %s32, %s44
      %s47 = sor.u32 %s45, %s46
      %p48 = scmp.eq.s32.totalorder %s47, 0
      %s50 = sadd.s32 %s49, 1
      %s51 = scalar_select %p48, %s49, %s50
      %p54 = pneg %p48
      %p55 = scmp.eq.s32.totalorder %s25, 1
      %p56 = por %p54, %p55
      %p57 = scmp.ne.s32.totalorder %s49, %s52
      %p58 = scmp.eq.s32.totalorder %s25, 0
      %p59 = por %p57, %p58
      %p60 = scmp.ne.s32.totalorder %s49, %s52
      %p61 = scmp.eq.s32.totalorder %s30, 1
      %p62 = por %p60, %p61
      %p63 = scmp.ne.s32.totalorder %s52, %s53
      %p64 = scmp.eq.s32.totalorder %s30, 0
      %p65 = por %p63, %p64
      %p66 = scmp.ne.s32.totalorder %s52, %s53
      %p67 = scmp.eq.s32.totalorder %s31, 1
      %p68 = por %p66, %p67
      %p70 = scmp.ne.s32.totalorder %s53, %s69
      %p71 = scmp.eq.s32.totalorder %s31, 0
      %p72 = por %p70, %p71
      %s73 = ssub.s32 %s33, %s40
      %s74 = ssub.s32 %s32, %s44
      %s75 = sor.u32 %s73, %s74
      %p76 = scmp.eq.s32.totalorder %s75, 0
      %s78 = sadd.s32 %s77, 1
      %s79 = scalar_select %p76, %s77, %s78
      %p82 = pneg %p76
      %p83 = scmp.eq.s32.totalorder %s25, 1
      %p84 = por %p82, %p83
      %p85 = scmp.ne.s32.totalorder %s77, %s80
      %p86 = scmp.eq.s32.totalorder %s25, 0
      %p87 = por %p85, %p86
      %p88 = scmp.ne.s32.totalorder %s77, %s80
      %p89 = scmp.eq.s32.totalorder %s30, 1
      %p90 = por %p88, %p89
      %p91 = scmp.ne.s32.totalorder %s80, %s81
      %p92 = scmp.eq.s32.totalorder %s30, 0
      %p93 = por %p91, %p92
      %p94 = scmp.ne.s32.totalorder %s80, %s81
      %p95 = scmp.eq.s32.totalorder %s31, 1
      %p96 = por %p94, %p95
      %p98 = scmp.ne.s32.totalorder %s81, %s97
      %p99 = scmp.eq.s32.totalorder %s31, 0
      %p100 = por %p98, %p99
      %s101 = ssub.s32 %s32, %s44
      %p102 = scmp.eq.s32.totalorder %s101, 0
      %s104 = sadd.s32 %s103, 1
      %s105 = scalar_select %p102, %s103, %s104
      %p108 = pneg %p102
      %p109 = scmp.eq.s32.totalorder %s25, 1
      %p110 = por %p108, %p109
      %p111 = scmp.ne.s32.totalorder %s103, %s106
      %p112 = scmp.eq.s32.totalorder %s25, 0
      %p113 = por %p111, %p112
      %p114 = scmp.ne.s32.totalorder %s103, %s106
      %p115 = scmp.eq.s32.totalorder %s30, 1
      %p116 = por %p114, %p115
      %p117 = scmp.ne.s32.totalorder %s106, %s107
      %p118 = scmp.eq.s32.totalorder %s30, 0
      %p119 = por %p117, %p118
      %p120 = scmp.ne.s32.totalorder %s106, %s107
      %p121 = scmp.eq.s32.totalorder %s31, 1
      %p122 = por %p120, %p121
      %p124 = scmp.ne.s32.totalorder %s107, %s123
      %p125 = scmp.eq.s32.totalorder %s31, 0
      %p126 = por %p124, %p125
      %s127 = ssub.s32 %s32, %s44
      %p128 = scmp.eq.s32.totalorder %s127, 0
      %s130 = sadd.s32 %s129, 1
      %s131 = scalar_select %p128, %s129, %s130
      %p134 = pneg %p128
      %p135 = scmp.eq.s32.totalorder %s25, 1
      %p136 = por %p134, %p135
      %p137 = scmp.ne.s32.totalorder %s129, %s132
      %p138 = scmp.eq.s32.totalorder %s25, 0
      %p139 = por %p137, %p138
      %p140 = scmp.ne.s32.totalorder %s129, %s132
      %p141 = scmp.eq.s32.totalorder %s30, 1
      %p142 = por %p140, %p141
      %p143 = scmp.ne.s32.totalorder %s132, %s133
      %p144 = scmp.eq.s32.totalorder %s30, 0
      %p145 = por %p143, %p144
      %p146 = scmp.ne.s32.totalorder %s132, %s133
      %p147 = scmp.eq.s32.totalorder %s31, 1
      %p148 = por %p146, %p147
      %p150 = scmp.ne.s32.totalorder %s133, %s149
      %p151 = scmp.eq.s32.totalorder %s31, 0
      %p152 = por %p150, %p151
      %s153 = ssub.s32 %s33, %s40
      %s154 = ssub.s32 %s32, %s44
      %s155 = sor.u32 %s153, %s154
      %p156 = scmp.eq.s32.totalorder %s155, 0
      %s158 = sadd.s32 %s157, 1
      %s159 = scalar_select %p156, %s157, %s158
      %p162 = pneg %p156
      %p163 = scmp.eq.s32.totalorder %s25, 1
      %p164 = por %p162, %p163
      %p165 = scmp.ne.s32.totalorder %s157, %s160
      %p166 = scmp.eq.s32.totalorder %s25, 0
      %p167 = por %p165, %p166
      %p168 = scmp.ne.s32.totalorder %s157, %s160
      %p169 = scmp.eq.s32.totalorder %s30, 1
      %p170 = por %p168, %p169
      %p171 = scmp.ne.s32.totalorder %s160, %s161
      %p172 = scmp.eq.s32.totalorder %s30, 0
      %p173 = por %p171, %p172
      %p174 = scmp.ne.s32.totalorder %s160, %s161
      %p175 = scmp.eq.s32.totalorder %s31, 1
      %p176 = por %p174, %p175
      %p178 = scmp.ne.s32.totalorder %s161, %s177
      %p179 = scmp.eq.s32.totalorder %s31, 0
      %p180 = por %p178, %p179
      %s181 = ssub.s32 %s33, %s40
      %s182 = ssub.s32 %s32, %s44
      %s183 = sor.u32 %s181, %s182
      %p184 = scmp.eq.s32.totalorder %s183, 0
      %s186 = sadd.s32 %s185, 1
      %s187 = scalar_select %p184, %s185, %s186
      %p190 = pneg %p184
      %p191 = scmp.eq.s32.totalorder %s25, 1
      %p192 = por %p190, %p191
      %p193 = scmp.ne.s32.totalorder %s185, %s188
      %p194 = scmp.eq.s32.totalorder %s25, 0
      %p195 = por %p193, %p194
      %p196 = scmp.ne.s32.totalorder %s185, %s188
      %p197 = scmp.eq.s32.totalorder %s30, 1
      %p198 = por %p196, %p197
      %p199 = scmp.ne.s32.totalorder %s188, %s189
      %p200 = scmp.eq.s32.totalorder %s30, 0
      %p201 = por %p199, %p200
      %p202 = scmp.ne.s32.totalorder %s188, %s189
      %p203 = scmp.eq.s32.totalorder %s31, 1
      %p204 = por %p202, %p203
      %p206 = scmp.ne.s32.totalorder %s189, %s205
      %p207 = scmp.eq.s32.totalorder %s31, 0
      %p208 = por %p206, %p207
      %p209 = scmp.le.s32.totalorder 1, %s25
      %p210 = scmp.lt.s32.totalorder %s25, 3
      %p211 = pnand %p209, %p210
      %p212 = pneg %p211
      // Predicated region
      $region9: #{tpu_custom_call.1} parent=5 // pred_check
        _
      $region10: #{tpu_custom_call.1} parent=5 // pred_check_branch
        %214 = sbr.rel (%p211) target = $region12
      $region11: #{tpu_custom_call.1} parent=5 // pred_region
        %s215 = ssub.s32 %s25, 1
        // Predicated region
        $region13: #{tpu_custom_call.1} parent=11 // pred_check
          %p216 = pneg %p119
        $region14: #{tpu_custom_call.1} parent=11 // pred_check_branch
          %218 = sbr.rel (%p216) target = $region16
        $region15: #{tpu_custom_call.1} parent=11 // pred_region
          %220 = vsyncadd [#allocation6], 0
          %s221 = smul.addr %s34, 4
          %s222 = scalar_lea.hbm %s2, %s221
          %s224 = sshll.u32 %s222, 4
          %s225 = int_to_ptr.hbm [resolvable:$true] %s224
          %s226 = sshll.u32 [#allocation7], 4
          %s227 = int_to_ptr.vmem [resolvable:$true] %s226
          %229 = dma.hbm_to_vmem [thread:$0]  %s225, 64, %s227, [#allocation6]
        $region16: #{tpu_custom_call.1} parent=11 // pred_fallthru
          _
        // Predicated region
        $region17: #{tpu_custom_call.1} parent=11 // pred_check
          %p230 = pneg %p145
        $region18: #{tpu_custom_call.1} parent=11 // pred_check_branch
          %232 = sbr.rel (%p230) target = $region20
        $region19: #{tpu_custom_call.1} parent=11 // pred_region
          %234 = vsyncadd [#allocation9], 0
          %s235 = smul.addr %s34, 4
          %s236 = scalar_lea.hbm %s3, %s235
          %s238 = sshll.u32 %s236, 4
          %s239 = int_to_ptr.hbm [resolvable:$true] %s238
          %s240 = sshll.u32 [#allocation8], 4
          %s241 = int_to_ptr.vmem [resolvable:$true] %s240
          %243 = dma.hbm_to_vmem [thread:$0]  %s239, 64, %s241, [#allocation9]
        $region20: #{tpu_custom_call.1} parent=11 // pred_fallthru
          _
      $region12: #{tpu_custom_call.1} parent=5 // pred_fallthru
        _
      %p244 = scmp.lt.s32.totalorder %s25, 2
      // Predicated region
      $region21: #{tpu_custom_call.1} parent=5 // pred_check
        %p245 = pneg %p244
      $region22: #{tpu_custom_call.1} parent=5 // pred_check_branch
        %247 = sbr.rel (%p245) target = $region24
      $region23: #{tpu_custom_call.1} parent=5 // pred_region
        // Predicated region
        $region25: #{tpu_custom_call.1} parent=23 // pred_check
          %p248 = pneg %p59
        $region26: #{tpu_custom_call.1} parent=23 // pred_check_branch
          %250 = sbr.rel (%p248) target = $region28
        $region27: #{tpu_custom_call.1} parent=23 // pred_region
          %s251 = sand.u32 %s49, 1
          %s252 = scalar_lea.sflag [#allocation3], %s251
          %s253 = sand.u32 %s49, 1
          %s254 = smul.addr %s253, 4
          %s255 = scalar_lea.vmem [#allocation2], %s254
          %257 = vsyncadd %s252, 0
          %s258 = sadd.s32 %s32, %s33
          %s259 = smul.addr %s258, 4
          %s260 = scalar_lea.hbm %s0, %s259
          %s262 = sshll.u32 %s260, 4
          %s263 = int_to_ptr.hbm [resolvable:$true] %s262
          %s264 = sshll.u32 %s255, 4
          %s265 = int_to_ptr.vmem [resolvable:$true] %s264
          %267 = dma.hbm_to_vmem [thread:$0]  %s263, 64, %s265, %s252
        $region28: #{tpu_custom_call.1} parent=23 // pred_fallthru
          _
        // Predicated region
        $region29: #{tpu_custom_call.1} parent=23 // pred_check
          %p268 = pneg %p87
        $region30: #{tpu_custom_call.1} parent=23 // pred_check_branch
          %270 = sbr.rel (%p268) target = $region32
        $region31: #{tpu_custom_call.1} parent=23 // pred_region
          %s271 = sand.u32 %s25, 1
          %s272 = scalar_lea.sflag [#allocation6], %s271
          %s273 = sand.u32 %s77, 1
          %s274 = smul.addr %s273, 4
          %s275 = scalar_lea.vmem [#allocation5], %s274
          %277 = vsyncadd %s272, 0
          %s278 = sadd.s32 %s32, %s33
          %s279 = smul.addr %s278, 4
          %s280 = scalar_lea.hbm %s1, %s279
          %s282 = sshll.u32 %s280, 4
          %s283 = int_to_ptr.hbm [resolvable:$true] %s282
          %s284 = sshll.u32 %s275, 4
          %s285 = int_to_ptr.vmem [resolvable:$true] %s284
          %287 = dma.hbm_to_vmem [thread:$0]  %s283, 64, %s285, %s272
        $region32: #{tpu_custom_call.1} parent=23 // pred_fallthru
          _
      $region24: #{tpu_custom_call.1} parent=5 // pred_fallthru
        _
      %p288 = scmp.le.s32.totalorder 1, %s25
      %p289 = scmp.lt.s32.totalorder %s25, 3
      %p290 = pnand %p288, %p289
      %p291 = pneg %p290
      // Predicated region
      $region33: #{tpu_custom_call.1} parent=5 // pred_check
        _
      $region34: #{tpu_custom_call.1} parent=5 // pred_check_branch
        %293 = sbr.rel (%p290) target = $region36
      $region35: #{tpu_custom_call.1} parent=5 // pred_region
        %s294 = ssub.s32 %s25, 1
        %s295 = sand.u32 %s52, 1
        %s296 = scalar_lea.sflag [#allocation3], %s295
        %s297 = sand.u32 %s52, 1
        %s298 = smul.addr %s297, 4
        %s299 = scalar_lea.vmem [#allocation2], %s298
        // Predicated region
        $region37: #{tpu_custom_call.1} parent=35 // pred_check
          %p300 = pneg %p65
        $region38: #{tpu_custom_call.1} parent=35 // pred_check_branch
          %302 = sbr.rel (%p300) target = $region40
        $region39: #{tpu_custom_call.1} parent=35 // pred_region
          %304 = dma.done %s296, 64
        $region40: #{tpu_custom_call.1} parent=35 // pred_fallthru
          _
        %s305 = sand.u32 %s30, 1
        %s306 = scalar_lea.sflag [#allocation6], %s305
        %s307 = sand.u32 %s80, 1
        %s308 = smul.addr %s307, 4
        %s309 = scalar_lea.vmem [#allocation5], %s308
        // Predicated region
        $region41: #{tpu_custom_call.1} parent=35 // pred_check
          %p310 = pneg %p93
        $region42: #{tpu_custom_call.1} parent=35 // pred_check_branch
          %312 = sbr.rel (%p310) target = $region44
        $region43: #{tpu_custom_call.1} parent=35 // pred_region
          %314 = dma.done %s306, 64
        $region44: #{tpu_custom_call.1} parent=35 // pred_fallthru
          _
        // Predicated region
        $region45: #{tpu_custom_call.1} parent=35 // pred_check
          %p315 = pneg %p119
        $region46: #{tpu_custom_call.1} parent=35 // pred_check_branch
          %317 = sbr.rel (%p315) target = $region48
        $region47: #{tpu_custom_call.1} parent=35 // pred_region
          %319 = dma.done [#allocation6], 64
        $region48: #{tpu_custom_call.1} parent=35 // pred_fallthru
          _
        // Predicated region
        $region49: #{tpu_custom_call.1} parent=35 // pred_check
          %p320 = pneg %p145
        $region50: #{tpu_custom_call.1} parent=35 // pred_check_branch
          %322 = sbr.rel (%p320) target = $region52
        $region51: #{tpu_custom_call.1} parent=35 // pred_region
          %324 = dma.done [#allocation9], 64
        $region52: #{tpu_custom_call.1} parent=35 // pred_fallthru
          _
        %s325 = sand.u32 %s52, 1
        %s326 = scalar_lea.sflag [#allocation3], %s325
        %s327 = sand.u32 %s52, 1
        %s328 = smul.addr %s327, 4
        %s329 = scalar_lea.vmem [#allocation2], %s328
        %p330 = pneg %p65
        %p331 = pneg %p62
        %s332 = sand.u32 %s30, 1
        %s333 = scalar_lea.sflag [#allocation6], %s332
        %s334 = sand.u32 %s80, 1
        %s335 = smul.addr %s334, 4
        %s336 = scalar_lea.vmem [#allocation5], %s335
        %p337 = pneg %p93
        %p338 = pneg %p90
        %p339 = pneg %p119
        %p340 = pneg %p116
        %p341 = pneg %p145
        %p342 = pneg %p142
        %p343 = pneg %p173
        %p344 = pneg %p170
        %s345 = sand.u32 %s160, 1
        %s346 = scalar_lea.sflag [#allocation4], %s345
        %s347 = sand.u32 %s160, 1
        %s348 = smul.addr %s347, 4
        %s349 = scalar_lea.vmem [#allocation10], %s348
        %p350 = pneg %p201
        %p351 = pneg %p198
        %s352 = sand.u32 %s188, 1
        %s353 = scalar_lea.sflag [#allocation12], %s352
        %s354 = sand.u32 %s188, 1
        %s355 = smul.addr %s354, 4
        %s356 = scalar_lea.vmem [#allocation11], %s355
        %v357 = vld [vmem:[#allocation7] sm:$0xf]
        %v358 = vunpack.c.l.bf16 %v357
        %v359 = vld [vmem:[#allocation8] sm:$0xf]
        %v360 = vunpack.c.l.bf16 %v359
        %v361 = vld [vmem:[%s299] sm:$0xf]
        %v362 = vunpack.c.l.bf16 %v361
        %364 = vrot.lane.b32.xlu0 %v362, 112
        %v365 = vpop.permute.xlu0 %364
        %367 = vrot.lane.b32.xlu0 %v362, 16
        %v368 = vpop.permute.xlu0 %367
        %vm370 = vcmask 130048
        %v371 = vsel %vm370, %v365, %v368
        %v372 = vmul.f32 %v362, %v358
        %v373 = vmul.f32 %v371, %v360
        %v374 = vadd.f32 %v372, %v373
        %v375 = vpack.c.bf16 %v374, %v374
        %vm376 = vcmask 257024
        %377 = vst.msk [vmem:[%s349] sm:$0xf] %vm376, %v375
        %v378 = vld [vmem:[%s309] sm:$0xf]
        %v379 = vunpack.c.l.bf16 %v378
        %381 = vrot.lane.b32.xlu0 %v379, 112
        %v382 = vpop.permute.xlu0 %381
        %384 = vrot.lane.b32.xlu0 %v379, 16
        %v385 = vpop.permute.xlu0 %384
        %v387 = vsel %vm370, %v382, %v385
        %v388 = vmul.f32 %v379, %v358
        %v389 = vmul.f32 %v387, %v360
        %v390 = vadd.f32 %v388, %v389
        %v391 = vpack.c.bf16 %v390, %v390
        %392 = vst.msk [vmem:[%s356] sm:$0xf] %vm376, %v391
        %s393 = sand.u32 %s160, 1
        %s394 = scalar_lea.sflag [#allocation4], %s393
        %s395 = sand.u32 %s160, 1
        %s396 = smul.addr %s395, 4
        %s397 = scalar_lea.vmem [#allocation10], %s396
        %s398 = sand.u32 %s188, 1
        %s399 = scalar_lea.sflag [#allocation12], %s398
        %s400 = sand.u32 %s188, 1
        %s401 = smul.addr %s400, 4
        %s402 = scalar_lea.vmem [#allocation11], %s401
        // Predicated region
        $region53: #{tpu_custom_call.1} parent=35 // pred_check
          %p403 = pneg %p170
        $region54: #{tpu_custom_call.1} parent=35 // pred_check_branch
          %405 = sbr.rel (%p403) target = $region56
        $region55: #{tpu_custom_call.1} parent=35 // pred_region
          %407 = vsyncadd %s394, 0
          %s408 = sadd.s32 %s34, %s35
          %s409 = smul.addr %s408, 4
          %s410 = scalar_lea.hbm %s4, %s409
          %s412 = sshll.u32 %s397, 4
          %s413 = int_to_ptr.vmem [resolvable:$true] %s412
          %s414 = sshll.u32 %s410, 4
          %s415 = int_to_ptr.hbm [resolvable:$true] %s414
          %417 = dma.vmem_to_hbm [thread:$0]  %s413, 64, %s415, %s394
        $region56: #{tpu_custom_call.1} parent=35 // pred_fallthru
          _
        // Predicated region
        $region57: #{tpu_custom_call.1} parent=35 // pred_check
          %p418 = pneg %p198
        $region58: #{tpu_custom_call.1} parent=35 // pred_check_branch
          %420 = sbr.rel (%p418) target = $region60
        $region59: #{tpu_custom_call.1} parent=35 // pred_region
          %422 = vsyncadd %s399, 0
          %s423 = sadd.s32 %s34, %s35
          %s424 = smul.addr %s423, 4
          %s425 = scalar_lea.hbm %s5, %s424
          %s427 = sshll.u32 %s402, 4
          %s428 = int_to_ptr.vmem [resolvable:$true] %s427
          %s429 = sshll.u32 %s425, 4
          %s430 = int_to_ptr.hbm [resolvable:$true] %s429
          %432 = dma.vmem_to_hbm [thread:$0]  %s428, 64, %s430, %s399
        $region60: #{tpu_custom_call.1} parent=35 // pred_fallthru
          _
      $region36: #{tpu_custom_call.1} parent=5 // pred_fallthru
        _
      %p433 = scmp.le.s32.totalorder 2, %s25
      // Predicated region
      $region61: #{tpu_custom_call.1} parent=5 // pred_check
        %p434 = pneg %p433
      $region62: #{tpu_custom_call.1} parent=5 // pred_check_branch
        %436 = sbr.rel (%p434) target = $region64
      $region63: #{tpu_custom_call.1} parent=5 // pred_region
        %s437 = ssub.s32 %s25, 2
        // Predicated region
        $region65: #{tpu_custom_call.1} parent=63 // pred_check
          %p438 = pneg %p176
        $region66: #{tpu_custom_call.1} parent=63 // pred_check_branch
          %440 = sbr.rel (%p438) target = $region68
        $region67: #{tpu_custom_call.1} parent=63 // pred_region
          %s441 = sand.u32 %s161, 1
          %s442 = scalar_lea.sflag [#allocation4], %s441
          %s443 = sand.u32 %s161, 1
          %s444 = smul.addr %s443, 4
          %s445 = scalar_lea.vmem [#allocation10], %s444
          %447 = dma.done %s442, 64
        $region68: #{tpu_custom_call.1} parent=63 // pred_fallthru
          _
        // Predicated region
        $region69: #{tpu_custom_call.1} parent=63 // pred_check
          %p448 = pneg %p204
        $region70: #{tpu_custom_call.1} parent=63 // pred_check_branch
          %450 = sbr.rel (%p448) target = $region72
        $region71: #{tpu_custom_call.1} parent=63 // pred_region
          %s451 = sand.u32 %s189, 1
          %s452 = scalar_lea.sflag [#allocation12], %s451
          %s453 = sand.u32 %s189, 1
          %s454 = smul.addr %s453, 4
          %s455 = scalar_lea.vmem [#allocation11], %s454
          %457 = dma.done %s452, 64
        $region72: #{tpu_custom_call.1} parent=63 // pred_fallthru
          _
      $region64: #{tpu_custom_call.1} parent=5 // pred_fallthru
        _
    $region6: #{tpu_custom_call.1} parent=1 // loop_footer
      %s29 = sadd.s32 1, %s25
    $region7: #{tpu_custom_call.1} parent=1 // loop_footer_branch
      %24 = sbr.rel target = $region3
    $region8: #{tpu_custom_call.1} parent=1 // loop_exit
      _
    %458 = vsyncpa [#allocation3], 1
    %s459 = scalar_lea.sflag [#allocation3], 1
    %460 = vsyncpa %s459, 1
    %461 = vsyncpa [#allocation6], 1
    %s462 = scalar_lea.sflag [#allocation6], 1
    %463 = vsyncpa %s462, 1
    %464 = vsyncpa [#allocation9], 1
    %465 = vsyncpa [#allocation4], 1
    %s466 = scalar_lea.sflag [#allocation4], 1
    %467 = vsyncpa %s466, 1
    %468 = vsyncpa [#allocation12], 1
    %s469 = scalar_lea.sflag [#allocation12], 1
    %470 = vsyncpa %s469, 1

</llo_original>
